<compile_context>
chip_gen: v6e
topology: v6e:2x2x1
jax: 0.10.0
libtpu: 0.0.40
codegen_flags: <defaults>
</compile_context>

<pallas_src>
import jax
import jax.numpy as jnp
from jax.experimental import pallas as pl
from jax.experimental.pallas import tpu as pltpu


def _round_up(x, m):
    return ((x + m - 1) // m) * m


def _ffn_kernel(x_ref, w1_ref, b1_ref, w2_ref, b2_ref, o_ref, acc_ref):
    # Grid: (row_tiles, pf_tiles); pf axis is a reduction ("arbitrary").
    # x_ref:  (tm, E)      input row tile (compute dtype)
    # w1_ref: (E, tp)      fc_1 weight slab, pre-transposed to [in, out]
    # b1_ref: (1, tp)      fc_1 bias slab (f32)
    # w2_ref: (tp, E)      fc_2 weight slab, pre-transposed to [in, out]
    # b2_ref: (1, E)       fc_2 bias (f32)
    # o_ref:  (tm, E)      output row tile (x.dtype)
    # acc_ref:(tm, E) f32  accumulator over the pf axis
    k = pl.program_id(1)

    @pl.when(k == 0)
    def _init():
        acc_ref[...] = jnp.zeros_like(acc_ref)

    x = x_ref[...]
    # fc_1 partial: (tm, E) @ (E, tp) -> (tm, tp) with f32 accumulation (MXU).
    h = jnp.dot(x, w1_ref[...], preferred_element_type=jnp.float32)
    h = jnp.maximum(h + b1_ref[...], 0.0)            # bias + relu in f32
    # TODO(synk): dropout is identity (eval mode); training-mode dropout would
    # mask h here via pltpu.prng_seed + pltpu.prng_random_bits.

    # fc_2 partial: (tm, tp) @ (tp, E) -> (tm, E), accumulated in f32.
    acc_ref[...] += jnp.dot(h.astype(x.dtype), w2_ref[...],
                            preferred_element_type=jnp.float32)

    @pl.when(k == pl.num_programs(1) - 1)
    def _finalize():
        o_ref[...] = (acc_ref[...] + b2_ref[...]).astype(o_ref.dtype)


def _select_config(M, E, P, itemsize, sub):
    """Pick lane-padded dims, tiles and VMEM limits for the current chip."""
    E_pad = _round_up(E, 128)
    P_pad128 = _round_up(P, 128)

    # ---- generation-aware VMEM budget ----
    try:
        vmem_phys = int(pltpu.get_tpu_info().vmem_capacity_bytes)
    except Exception:                           # defensive: assume v7x-sized
        vmem_phys = 64 * 1024 * 1024
    if vmem_phys >= 96 * 1024 * 1024:           # v5e / v6e: 128 MiB physical
        vmem_cap = 100 * 1024 * 1024
    else:                                       # v7x: 64 MiB physical per TC
        vmem_cap = 52 * 1024 * 1024
    budget = int(vmem_cap * 0.85)               # headroom for Mosaic internals

    # ---- weight residency: keep W1+W2 fully in VMEM (single-buffered) if
    # they fit in ~60% of the budget; otherwise stream pf in wide slabs. ----
    w_bytes_single = 2 * E_pad * P_pad128 * itemsize
    weights_resident = w_bytes_single <= int(budget * 0.6)

    if weights_resident:
        tp = P_pad128
        w_fixed = w_bytes_single                         # Buffered(1) weights
    else:
        tp = max(256, min(2048, (P_pad128 // 256) * 256))
        while tp > 256 and 4 * E_pad * tp * itemsize > budget // 2:
            tp = max(256, ((tp // 2) // 256) * 256)
        w_fixed = 4 * E_pad * tp * itemsize              # double-buffered slabs
    P_pad = _round_up(P, tp)

    fixed = w_fixed + 2 * (tp + E_pad) * 4               # + double-buffered biases

    # Per-row VMEM of the row tile: x/out double-buffered, f32 accumulator,
    # f32 hidden slab plus its compute-dtype copy for the second matmul.
    per_row = 4 * E_pad * itemsize + E_pad * 4 + tp * 4 + tp * itemsize

    # Large row tile when streaming weights -> high arithmetic intensity.
    tm_target = 512 if weights_resident else 1024
    tm = max(sub, _round_up(min(tm_target, _round_up(M, sub)), sub))
    while tm > sub and fixed + tm * per_row > budget:
        tm = max(sub, _round_up(tm // 2, sub))
    M_pad = _round_up(M, tm)

    est = fixed + tm * per_row
    vmem_limit = int(min(vmem_cap, max(est + 4 * 1024 * 1024, 32 * 1024 * 1024)))
    return E_pad, P_pad, tp, tm, M_pad, weights_resident, vmem_limit, vmem_cap


def positionwise_feedforward(x, w1, b1, w2, b2, *, compute_dtype=None):
    """FFN forward: fc_2(dropout(relu(fc_1(x)))), dropout in eval mode.

    x:  [..., embed_dim]
    w1: [pf_dim, embed_dim]   (PyTorch nn.Linear weight layout [out, in])
    b1: [pf_dim]
    w2: [embed_dim, pf_dim]
    b2: [embed_dim]
    compute_dtype: optional matmul dtype (e.g. jnp.bfloat16 for f32 inputs);
                   accumulation, bias adds and relu are always f32.
    """
    orig_shape = x.shape
    E = orig_shape[-1]
    P, E_w = w1.shape
    assert E_w == E and w2.shape == (E, P) and b1.shape == (P,) and b2.shape == (E,)

    cdtype = jnp.dtype(compute_dtype) if compute_dtype is not None else jnp.dtype(x.dtype)
    itemsize = cdtype.itemsize
    sub = 16 if cdtype == jnp.bfloat16 else 8

    x2d = x.reshape(-1, E)
    M = x2d.shape[0]

    (E_pad, P_pad, tp, tm, M_pad, weights_resident,
     vmem_limit, vmem_cap) = _select_config(M, E, P, itemsize, sub)

    def _pad2d(a, r, c):
        pr, pc = r - a.shape[0], c - a.shape[1]
        if pr == 0 and pc == 0:
            return a
        return jnp.pad(a, ((0, pr), (0, pc)))

    # One-time wrapper-side transpose to canonical [K, N] layout so the kernel
    # matmuls need no per-step XLU transposes of the weight slabs.
    x_p = _pad2d(x2d.astype(cdtype), M_pad, E_pad)
    w1t_p = _pad2d(w1.T.astype(cdtype), E_pad, P_pad)          # [E, P]
    w2t_p = _pad2d(w2.T.astype(cdtype), P_pad, E_pad)          # [P, E]
    b1_p = _pad2d(b1.astype(jnp.float32).reshape(1, P), 1, P_pad)
    b2_p = _pad2d(b2.astype(jnp.float32).reshape(1, E), 1, E_pad)

    grid = (M_pad // tm, P_pad // tp)
    n_row_tiles = grid[0]

    # Honest DMA-traffic estimate: streamed weights are re-read once per row
    # tile (the pf index cycles for every i); resident weights are read once.
    w_bytes = 2 * E_pad * P_pad * itemsize
    cost = pl.CostEstimate(
        flops=4 * M_pad * E_pad * P_pad,
        transcendentals=0,
        bytes_accessed=int(2 * M_pad * E_pad * itemsize
                           + (w_bytes if weights_resident else w_bytes * n_row_tiles)
                           + (P_pad + E_pad) * 4),
    )

    # Shard rows across TensorCores only when each core stays MXU-bound
    # (resident weights, or a large row tile while streaming).
    row_sem = "parallel" if (weights_resident or tm >= 512) else "arbitrary"

    def _call(single_buffer_weights):
        w_kw = {"pipeline_mode": pl.Buffered(1)} if single_buffer_weights else {}
        limit = vmem_limit
        if weights_resident and not single_buffer_weights:
            limit = int(min(vmem_cap, vmem_limit + w_bytes))
        in_specs = [
            pl.BlockSpec((tm, E_pad), lambda i, k: (i, 0)),            # x rows
            pl.BlockSpec((E_pad, tp), lambda i, k: (0, k), **w_kw),    # W1^T
            pl.BlockSpec((1, tp),     lambda i, k: (0, k), **w_kw),    # b1
            pl.BlockSpec((tp, E_pad), lambda i, k: (k, 0), **w_kw),    # W2^T
            pl.BlockSpec((1, E_pad),  lambda i, k: (0, 0), **w_kw),    # b2
        ]
        return pl.pallas_call(
            _ffn_kernel,
            out_shape=jax.ShapeDtypeStruct((M_pad, E_pad), x.dtype),
            grid_spec=pltpu.PrefetchScalarGridSpec(
                num_scalar_prefetch=0,
                grid=grid,
                in_specs=in_specs,
                out_specs=pl.BlockSpec((tm, E_pad), lambda i, k: (i, 0)),
                scratch_shapes=[pltpu.VMEM((tm, E_pad), jnp.float32)],
            ),
            compiler_params=pltpu.CompilerParams(
                dimension_semantics=(row_sem, "arbitrary"),
                vmem_limit_bytes=limit,
            ),
            cost_estimate=cost,
        )(x_p, w1t_p, b1_p, w2t_p, b2_p)

    if weights_resident:
        try:
            out2d = _call(True)
        except Exception:
            # Fallback if this JAX build rejects single-buffered BlockSpecs.
            out2d = _call(False)
    else:
        out2d = _call(False)

    return out2d[:M, :E].reshape(orig_shape)


def _reference(x, w1, b1, w2, b2):
    h = jnp.maximum(jnp.einsum("...e,pe->...p", x, w1) + b1, 0.0)
    return jnp.einsum("...p,ep->...e", h, w2) + b2


def _make_params(key, embed_dim, pf_dim):
    k1, k2, k3, k4 = jax.random.split(key, 4)
    bound1 = 1.0 / (embed_dim ** 0.5)
    bound2 = 1.0 / (pf_dim ** 0.5)
    w1 = jax.random.uniform(k1, (pf_dim, embed_dim), jnp.float32, -bound1, bound1)
    b1 = jax.random.uniform(k2, (pf_dim,), jnp.float32, -bound1, bound1)
    w2 = jax.random.uniform(k3, (embed_dim, pf_dim), jnp.float32, -bound2, bound2)
    b2 = jax.random.uniform(k4, (embed_dim,), jnp.float32, -bound2, bound2)
    return w1, b1, w2, b2


if __name__ == "__main__":
    key = jax.random.PRNGKey(0)
    kx, kp, kx2, kp2, kx3, kp3 = jax.random.split(key, 6)

    # Case 1: module-consistent small shapes (batch=2, seq=8, embed=32, pf=64).
    batch, seq, embed_dim, pf_dim = 2, 8, 32, 64
    x = jax.random.normal(kx, (batch, seq, embed_dim), dtype=jnp.float32)
    w1, b1, w2, b2 = _make_params(kp, embed_dim, pf_dim)
    out = jax.block_until_ready(positionwise_feedforward(x, w1, b1, w2, b2))
    ref = _reference(x, w1, b1, w2, b2)
    assert out.shape == (batch, seq, embed_dim)
    assert jnp.allclose(out, ref, atol=1e-4, rtol=1e-4), "case1 mismatch vs reference"

    # Case 2: non-aligned shapes to exercise row/lane padding paths.
    x2 = jax.random.normal(kx2, (3, 7, 48), dtype=jnp.float32)
    p2 = _make_params(kp2, 48, 96)
    out2 = jax.block_until_ready(positionwise_feedforward(x2, *p2))
    ref2 = _reference(x2, *p2)
    assert out2.shape == (3, 7, 48)
    assert jnp.allclose(out2, ref2, atol=1e-4, rtol=1e-4), "case2 mismatch vs reference"

    # Case 3: f32 input with the bf16 MXU compute path (inference default on v5e).
    x3 = jax.random.normal(kx3, (2, 8, 64), dtype=jnp.float32)
    p3 = _make_params(kp3, 64, 128)
    out3 = jax.block_until_ready(
        positionwise_feedforward(x3, *p3, compute_dtype=jnp.bfloat16))
    ref3 = _reference(x3, *p3)
    assert out3.shape == (2, 8, 64) and out3.dtype == jnp.float32
    assert jnp.allclose(out3, ref3, atol=5e-2, rtol=5e-2), "case3 mismatch vs reference"

    print("KERNEL_OK")
</pallas_src>

<mosaic_0001>
module attributes {stable_mosaic.version = 11 : i64} {
  func.func @_ffn_kernel(%arg0: i32, %arg1: i32, %arg2: memref<16x128xf32, #tpu.memory_space<vmem>>, %arg3: memref<128x128xf32, #tpu.memory_space<vmem>>, %arg4: memref<1x128xf32, #tpu.memory_space<vmem>>, %arg5: memref<128x128xf32, #tpu.memory_space<vmem>>, %arg6: memref<1x128xf32, #tpu.memory_space<vmem>>, %arg7: memref<16x128xf32, #tpu.memory_space<vmem>>, %arg8: memref<16x128xf32, #tpu.memory_space<vmem>>) attributes {dimension_semantics = [#tpu.dimension_semantics<parallel>, #tpu.dimension_semantics<arbitrary>], iteration_bounds = array<i64: 1, 1>, scalar_prefetch = 0 : i64, scratch_operands = 1 : i64, tpu.core_type = #tpu.core_type<tc>, window_params = [{transform_indices = @transform_0, window_bounds = array<i64: 16, 128>}, {pipeline_mode = #tpu.pipeline_mode<synchronous>, transform_indices = @transform_1, window_bounds = array<i64: 128, 128>}, {pipeline_mode = #tpu.pipeline_mode<synchronous>, transform_indices = @transform_2, window_bounds = array<i64: 1, 128>}, {pipeline_mode = #tpu.pipeline_mode<synchronous>, transform_indices = @transform_3, window_bounds = array<i64: 128, 128>}, {pipeline_mode = #tpu.pipeline_mode<synchronous>, transform_indices = @transform_4, window_bounds = array<i64: 1, 128>}, {transform_indices = @transform_5, window_bounds = array<i64: 16, 128>}]} {
    %c0_i32 = arith.constant 0 : i32
    %0 = arith.cmpi eq, %arg1, %c0_i32 : i32
    %1 = arith.extui %0 : i1 to i32
    %c0_i32_0 = arith.constant 0 : i32
    %2 = arith.cmpi ne, %1, %c0_i32_0 : i32
    scf.if %2 {
      %cst_16 = arith.constant 0.000000e+00 : f32
      %19 = vector.broadcast %cst_16 : f32 to vector<16x128xf32>
      %c0_17 = arith.constant 0 : index
      %c0_18 = arith.constant 0 : index
      %20 = vector.load %arg8[%c0_17, %c0_18] : memref<16x128xf32, #tpu.memory_space<vmem>>, vector<16x128xf32>
      tpu.vector_store %arg8[%c0_17, %c0_18], %19 {strides = array<i32>} : memref<16x128xf32, #tpu.memory_space<vmem>>, vector<16x128xf32>,
    } else {
    }
    %c0 = arith.constant 0 : index
    %c0_1 = arith.constant 0 : index
    %3 = vector.load %arg2[%c0, %c0_1] : memref<16x128xf32, #tpu.memory_space<vmem>>, vector<16x128xf32>
    %c0_2 = arith.constant 0 : index
    %c0_3 = arith.constant 0 : index
    %4 = vector.load %arg3[%c0_2, %c0_3] : memref<128x128xf32, #tpu.memory_space<vmem>>, vector<128x128xf32>
    %cst = arith.constant dense<0.000000e+00> : vector<16x128xf32>
    %5 = tpu.matmul %3, %4, %cst {dimension_numbers = #tpu.dot_dimension_numbers<[1], [0], [0], [1], [0, 0, 1, 1], [], []>} : vector<16x128xf32>, vector<128x128xf32>, vector<16x128xf32> -> vector<16x128xf32>
    %c0_4 = arith.constant 0 : index
    %c0_5 = arith.constant 0 : index
    %6 = vector.load %arg4[%c0_4, %c0_5] : memref<1x128xf32, #tpu.memory_space<vmem>>, vector<1x128xf32>
    %7 = vector.broadcast %6 : vector<1x128xf32> to vector<16x128xf32>
    %8 = arith.addf %5, %7 : vector<16x128xf32>
    %cst_6 = arith.constant 0.000000e+00 : f32
    %9 = vector.broadcast %cst_6 : f32 to vector<16x128xf32>
    %10 = arith.maximumf %8, %9 : vector<16x128xf32>
    %c0_7 = arith.constant 0 : index
    %c0_8 = arith.constant 0 : index
    %11 = vector.load %arg8[%c0_7, %c0_8] : memref<16x128xf32, #tpu.memory_space<vmem>>, vector<16x128xf32>
    %c0_9 = arith.constant 0 : index
    %c0_10 = arith.constant 0 : index
    %12 = vector.load %arg5[%c0_9, %c0_10] : memref<128x128xf32, #tpu.memory_space<vmem>>, vector<128x128xf32>
    %cst_11 = arith.constant dense<0.000000e+00> : vector<16x128xf32>
    %13 = tpu.matmul %10, %12, %cst_11 {dimension_numbers = #tpu.dot_dimension_numbers<[1], [0], [0], [1], [0, 0, 1, 1], [], []>} : vector<16x128xf32>, vector<128x128xf32>, vector<16x128xf32> -> vector<16x128xf32>
    %14 = arith.addf %11, %13 : vector<16x128xf32>
    %c0_12 = arith.constant 0 : index
    %c0_13 = arith.constant 0 : index
    %15 = vector.load %arg8[%c0_12, %c0_13] : memref<16x128xf32, #tpu.memory_space<vmem>>, vector<16x128xf32>
    tpu.vector_store %arg8[%c0_12, %c0_13], %14 {strides = array<i32>} : memref<16x128xf32, #tpu.memory_space<vmem>>, vector<16x128xf32>,
    %c0_i32_14 = arith.constant 0 : i32
    %16 = arith.cmpi eq, %arg1, %c0_i32_14 : i32
    %17 = arith.extui %16 : i1 to i32
    %c0_i32_15 = arith.constant 0 : i32
    %18 = arith.cmpi ne, %17, %c0_i32_15 : i32
    scf.if %18 {
      %c0_16 = arith.constant 0 : index
      %c0_17 = arith.constant 0 : index
      %19 = vector.load %arg8[%c0_16, %c0_17] : memref<16x128xf32, #tpu.memory_space<vmem>>, vector<16x128xf32>
      %c0_18 = arith.constant 0 : index
      %c0_19 = arith.constant 0 : index
      %20 = vector.load %arg6[%c0_18, %c0_19] : memref<1x128xf32, #tpu.memory_space<vmem>>, vector<1x128xf32>
      %21 = vector.broadcast %20 : vector<1x128xf32> to vector<16x128xf32>
      %22 = arith.addf %19, %21 : vector<16x128xf32>
      %c0_20 = arith.constant 0 : index
      %c0_21 = arith.constant 0 : index
      %23 = vector.load %arg7[%c0_20, %c0_21] : memref<16x128xf32, #tpu.memory_space<vmem>>, vector<16x128xf32>
      tpu.vector_store %arg7[%c0_20, %c0_21], %22 {strides = array<i32>} : memref<16x128xf32, #tpu.memory_space<vmem>>, vector<16x128xf32>,
    } else {
    }
    return
  }
  func.func @transform_0(%arg0: i32, %arg1: i32) -> (i32, i32) {
    %c0_i32 = arith.constant 0 : i32
    %c0_i32_0 = arith.constant 0 : i32
    return %arg0, %c0_i32 : i32, i32
  }
  func.func @transform_1(%arg0: i32, %arg1: i32) -> (i32, i32) {
    %c0_i32 = arith.constant 0 : i32
    %c0_i32_0 = arith.constant 0 : i32
    return %c0_i32, %arg1 : i32, i32
  }
  func.func @transform_2(%arg0: i32, %arg1: i32) -> (i32, i32) {
    %c0_i32 = arith.constant 0 : i32
    %c0_i32_0 = arith.constant 0 : i32
    return %c0_i32, %arg1 : i32, i32
  }
  func.func @transform_3(%arg0: i32, %arg1: i32) -> (i32, i32) {
    %c0_i32 = arith.constant 0 : i32
    %c0_i32_0 = arith.constant 0 : i32
    return %arg1, %c0_i32 : i32, i32
  }
  func.func @transform_4(%arg0: i32, %arg1: i32) -> (i32, i32) {
    %c0_i32 = arith.constant 0 : i32
    %c0_i32_0 = arith.constant 0 : i32
    %c0_i32_1 = arith.constant 0 : i32
    return %c0_i32, %c0_i32_0 : i32, i32
  }
  func.func @transform_5(%arg0: i32, %arg1: i32) -> (i32, i32) {
    %c0_i32 = arith.constant 0 : i32
    %c0_i32_0 = arith.constant 0 : i32
    return %arg0, %c0_i32 : i32, i32
  }
}

module attributes {stable_mosaic.version = 11 : i64} {
  func.func @_ffn_kernel(%arg0: i32, %arg1: i32, %arg2: memref<16x128xf32, #tpu.memory_space<vmem>>, %arg3: memref<128x128xf32, #tpu.memory_space<vmem>>, %arg4: memref<1x128xf32, #tpu.memory_space<vmem>>, %arg5: memref<128x128xf32, #tpu.memory_space<vmem>>, %arg6: memref<1x128xf32, #tpu.memory_space<vmem>>, %arg7: memref<16x128xf32, #tpu.memory_space<vmem>>, %arg8: memref<16x128xf32, #tpu.memory_space<vmem>>) attributes {dimension_semantics = [#tpu.dimension_semantics<parallel>, #tpu.dimension_semantics<arbitrary>], iteration_bounds = array<i64: 1, 1>, scalar_prefetch = 0 : i64, scratch_operands = 1 : i64, tpu.core_type = #tpu.core_type<tc>, window_params = [{transform_indices = @transform_0, window_bounds = array<i64: 16, 128>}, {transform_indices = @transform_1, window_bounds = array<i64: 128, 128>}, {transform_indices = @transform_2, window_bounds = array<i64: 1, 128>}, {transform_indices = @transform_3, window_bounds = array<i64: 128, 128>}, {pipeline_mode = #tpu.pipeline_mode<synchronous>, transform_indices = @transform_4, window_bounds = array<i64: 1, 128>}, {transform_indices = @transform_5, window_bounds = array<i64: 16, 128>}]} {
    %c0_i32 = arith.constant 0 : i32
    %0 = arith.cmpi eq, %arg1, %c0_i32 : i32
    %1 = arith.extui %0 : i1 to i32
    %c0_i32_0 = arith.constant 0 : i32
    %2 = arith.cmpi ne, %1, %c0_i32_0 : i32
    scf.if %2 {
      %cst_16 = arith.constant 0.000000e+00 : f32
      %19 = vector.broadcast %cst_16 : f32 to vector<16x128xf32>
      %c0_17 = arith.constant 0 : index
      %c0_18 = arith.constant 0 : index
      %20 = vector.load %arg8[%c0_17, %c0_18] : memref<16x128xf32, #tpu.memory_space<vmem>>, vector<16x128xf32>
      tpu.vector_store %arg8[%c0_17, %c0_18], %19 {strides = array<i32>} : memref<16x128xf32, #tpu.memory_space<vmem>>, vector<16x128xf32>,
    } else {
    }
    %c0 = arith.constant 0 : index
    %c0_1 = arith.constant 0 : index
    %3 = vector.load %arg2[%c0, %c0_1] : memref<16x128xf32, #tpu.memory_space<vmem>>, vector<16x128xf32>
    %c0_2 = arith.constant 0 : index
    %c0_3 = arith.constant 0 : index
    %4 = vector.load %arg3[%c0_2, %c0_3] : memref<128x128xf32, #tpu.memory_space<vmem>>, vector<128x128xf32>
    %cst = arith.constant dense<0.000000e+00> : vector<16x128xf32>
    %5 = tpu.matmul %3, %4, %cst {dimension_numbers = #tpu.dot_dimension_numbers<[1], [0], [0], [1], [0, 0, 1, 1], [], []>} : vector<16x128xf32>, vector<128x128xf32>, vector<16x128xf32> -> vector<16x128xf32>
    %c0_4 = arith.constant 0 : index
    %c0_5 = arith.constant 0 : index
    %6 = vector.load %arg4[%c0_4, %c0_5] : memref<1x128xf32, #tpu.memory_space<vmem>>, vector<1x128xf32>
    %7 = vector.broadcast %6 : vector<1x128xf32> to vector<16x128xf32>
    %8 = arith.addf %5, %7 : vector<16x128xf32>
    %cst_6 = arith.constant 0.000000e+00 : f32
    %9 = vector.broadcast %cst_6 : f32 to vector<16x128xf32>
    %10 = arith.maximumf %8, %9 : vector<16x128xf32>
    %c0_7 = arith.constant 0 : index
    %c0_8 = arith.constant 0 : index
    %11 = vector.load %arg8[%c0_7, %c0_8] : memref<16x128xf32, #tpu.memory_space<vmem>>, vector<16x128xf32>
    %c0_9 = arith.constant 0 : index
    %c0_10 = arith.constant 0 : index
    %12 = vector.load %arg5[%c0_9, %c0_10] : memref<128x128xf32, #tpu.memory_space<vmem>>, vector<128x128xf32>
    %cst_11 = arith.constant dense<0.000000e+00> : vector<16x128xf32>
    %13 = tpu.matmul %10, %12, %cst_11 {dimension_numbers = #tpu.dot_dimension_numbers<[1], [0], [0], [1], [0, 0, 1, 1], [], []>} : vector<16x128xf32>, vector<128x128xf32>, vector<16x128xf32> -> vector<16x128xf32>
    %14 = arith.addf %11, %13 : vector<16x128xf32>
    %c0_12 = arith.constant 0 : index
    %c0_13 = arith.constant 0 : index
    %15 = vector.load %arg8[%c0_12, %c0_13] : memref<16x128xf32, #tpu.memory_space<vmem>>, vector<16x128xf32>
    tpu.vector_store %arg8[%c0_12, %c0_13], %14 {strides = array<i32>} : memref<16x128xf32, #tpu.memory_space<vmem>>, vector<16x128xf32>,
    %c0_i32_14 = arith.constant 0 : i32
    %16 = arith.cmpi eq, %arg1, %c0_i32_14 : i32
    %17 = arith.extui %16 : i1 to i32
    %c0_i32_15 = arith.constant 0 : i32
    %18 = arith.cmpi ne, %17, %c0_i32_15 : i32
    scf.if %18 {
      %c0_16 = arith.constant 0 : index
      %c0_17 = arith.constant 0 : index
      %19 = vector.load %arg8[%c0_16, %c0_17] : memref<16x128xf32, #tpu.memory_space<vmem>>, vector<16x128xf32>
      %c0_18 = arith.constant 0 : index
      %c0_19 = arith.constant 0 : index
      %20 = vector.load %arg6[%c0_18, %c0_19] : memref<1x128xf32, #tpu.memory_space<vmem>>, vector<1x128xf32>
      %21 = vector.broadcast %20 : vector<1x128xf32> to vector<16x128xf32>
      %22 = arith.addf %19, %21 : vector<16x128xf32>
      %c0_20 = arith.constant 0 : index
      %c0_21 = arith.constant 0 : index
      %23 = vector.load %arg7[%c0_20, %c0_21] : memref<16x128xf32, #tpu.memory_space<vmem>>, vector<16x128xf32>
      tpu.vector_store %arg7[%c0_20, %c0_21], %22 {strides = array<i32>} : memref<16x128xf32, #tpu.memory_space<vmem>>, vector<16x128xf32>,
    } else {
    }
    return
  }
  func.func @transform_0(%arg0: i32, %arg1: i32) -> (i32, i32) {
    %c0_i32 = arith.constant 0 : i32
    %c0_i32_0 = arith.constant 0 : i32
    return %arg0, %c0_i32 : i32, i32
  }
  func.func @transform_1(%arg0: i32, %arg1: i32) -> (i32, i32) {
    %c0_i32 = arith.constant 0 : i32
    %c0_i32_0 = arith.constant 0 : i32
    return %c0_i32, %arg1 : i32, i32
  }
  func.func @transform_2(%arg0: i32, %arg1: i32) -> (i32, i32) {
    %c0_i32 = arith.constant 0 : i32
    %c0_i32_0 = arith.constant 0 : i32
    return %c0_i32, %arg1 : i32, i32
  }
  func.func @transform_3(%arg0: i32, %arg1: i32) -> (i32, i32) {
    %c0_i32 = arith.constant 0 : i32
    %c0_i32_0 = arith.constant 0 : i32
    return %arg1, %c0_i32 : i32, i32
  }
  func.func @transform_4(%arg0: i32, %arg1: i32) -> (i32, i32) {
    %c0_i32 = arith.constant 0 : i32
    %c0_i32_0 = arith.constant 0 : i32
    %c0_i32_1 = arith.constant 0 : i32
    return %c0_i32, %c0_i32_0 : i32, i32
  }
  func.func @transform_5(%arg0: i32, %arg1: i32) -> (i32, i32) {
    %c0_i32 = arith.constant 0 : i32
    %c0_i32_0 = arith.constant 0 : i32
    return %arg0, %c0_i32 : i32, i32
  }
}

</mosaic_0001>

<llo_original>
// kernel: tpu_custom_call.1
$region0: #{tpu_custom_call.1}
  #allocation0 [shape = 'u32[]', space=smem, size = 0x4, offset = 0x4, fixed_abs, tag = 'smem constant byte address 0x4 - core index']
  #allocation1 [shape = 'u32[144,128]{1,0:T(1,128)}', space=vmem, size = 0x12000, scoped, tag = 'internal scratch']
  #allocation2 [shape = 'f32[16,128]{1,0:T(8,128)}', space=vmem, size = 0x2000, scoped, tag = 'scratch operand']
  %s0 = inlined_call_operand.hbm [shape: f32[16,128], index: 0, kind: input, shape index: {}]
  %s1 = inlined_call_operand.hbm [shape: f32[128,128], index: 1, kind: input, shape index: {}]
  %s2 = inlined_call_operand.vmem [shape: f32[1,128], index: 2, kind: input, shape index: {}]
  %s3 = inlined_call_operand.hbm [shape: f32[128,128], index: 3, kind: input, shape index: {}]
  %s4 = inlined_call_operand.vmem [shape: f32[1,128], index: 4, kind: input, shape index: {}]
  %s5 = inlined_call_operand.hbm [shape: f32[16,128], index: 5, kind: output, shape index: {}]
  %s6 = sld [smem:[#allocation0]]
  $region50: #{tpu_custom_call.1} parent=0
    _
  %s8 = ssub.s32 1, %s6
  %s9 = scalar_select 0, %s8, %s6
  $region1: #{tpu_custom_call.1} parent=0
    #allocation3 [shape = 'u8[8192]{0}', space=vmem, size = 0x2000, scoped, tag = 'input window, operand 0, single buffered']
    #allocation4 [shape = 's32[1]{0}', space=sflag, size = 0x4, scoped, tag = 'scoped memory for tpu_custom_call.1']
    #allocation5 [shape = 's32[1]{0}', space=sflag, size = 0x4, scoped, tag = 'scoped memory for tpu_custom_call.1']
    #allocation6 [shape = 'u8[65536]{0}', space=vmem, size = 0x10000, scoped, tag = 'input window, operand 1, single buffered']
    #allocation7 [shape = 's32[1]{0}', space=sflag, size = 0x4, scoped, tag = 'scoped memory for tpu_custom_call.1']
    #allocation8 [shape = 'u8[65536]{0}', space=vmem, size = 0x10000, scoped, tag = 'input window, operand 3, single buffered']
    #allocation9 [shape = 'u8[8192]{0}', space=vmem, size = 0x2000, scoped, tag = 'output window, operand 0, single buffered']
    %10 = vsyncpa [#allocation4], 0
    %11 = vsyncpa [#allocation7], 0
    %12 = vsyncpa [#allocation5], 0
    // Predicated region
    $region2: #{tpu_custom_call.1} parent=1 // pred_check
      _
    $region3: #{tpu_custom_call.1} parent=1 // pred_check_branch
      %14 = sbr.rel (0) target = $region5
    $region4: #{tpu_custom_call.1} parent=1 // pred_region
      %s16 = ssub.s32 256, 256
      %17 = vsyncadd [#allocation4], %s16
      %s18 = sshll.u32 [#allocation3], 4
      %s19 = int_to_ptr.vmem [resolvable:$true] %s18
      %24 = dma.hbm_to_vmem [thread:$0]  %s0, 256, %s19, [#allocation4], 128, 128, 8
    $region5: #{tpu_custom_call.1} parent=1 // pred_fallthru
      _
    // Predicated region
    $region6: #{tpu_custom_call.1} parent=1 // pred_check
      _
    $region7: #{tpu_custom_call.1} parent=1 // pred_check_branch
      %26 = sbr.rel (0) target = $region9
    $region8: #{tpu_custom_call.1} parent=1 // pred_region
      %s28 = ssub.s32 2048, 2048
      %29 = vsyncadd [#allocation7], %s28
      %s30 = sshll.u32 [#allocation6], 4
      %s31 = int_to_ptr.vmem [resolvable:$true] %s30
      %36 = dma.hbm_to_vmem [thread:$0]  %s1, 2048, %s31, [#allocation7], 128, 128, 8
    $region9: #{tpu_custom_call.1} parent=1 // pred_fallthru
      _
    // Predicated region
    $region10: #{tpu_custom_call.1} parent=1 // pred_check
      _
    $region11: #{tpu_custom_call.1} parent=1 // pred_check_branch
      %38 = sbr.rel (0) target = $region13
    $region12: #{tpu_custom_call.1} parent=1 // pred_region
      _
    $region13: #{tpu_custom_call.1} parent=1 // pred_fallthru
      _
    // Predicated region
    $region14: #{tpu_custom_call.1} parent=1 // pred_check
      _
    $region15: #{tpu_custom_call.1} parent=1 // pred_check_branch
      %40 = sbr.rel (0) target = $region17
    $region16: #{tpu_custom_call.1} parent=1 // pred_region
      %s42 = ssub.s32 2048, 2048
      %43 = vsyncadd [#allocation7], %s42
      %s44 = sshll.u32 [#allocation8], 4
      %s45 = int_to_ptr.vmem [resolvable:$true] %s44
      %50 = dma.hbm_to_vmem [thread:$0]  %s3, 2048, %s45, [#allocation7], 128, 128, 8
    $region17: #{tpu_custom_call.1} parent=1 // pred_fallthru
      _
    // Predicated region
    $region18: #{tpu_custom_call.1} parent=1 // pred_check
      _
    $region19: #{tpu_custom_call.1} parent=1 // pred_check_branch
      %52 = sbr.rel (0) target = $region21
    $region20: #{tpu_custom_call.1} parent=1 // pred_region
      _
    $region21: #{tpu_custom_call.1} parent=1 // pred_fallthru
      _
    // Predicated region
    $region22: #{tpu_custom_call.1} parent=1 // pred_check
      _
    $region23: #{tpu_custom_call.1} parent=1 // pred_check_branch
      %54 = sbr.rel (0) target = $region25
    $region24: #{tpu_custom_call.1} parent=1 // pred_region
      %55 = dma.done [#allocation4], 256
    $region25: #{tpu_custom_call.1} parent=1 // pred_fallthru
      _
    // Predicated region
    $region26: #{tpu_custom_call.1} parent=1 // pred_check
      _
    $region27: #{tpu_custom_call.1} parent=1 // pred_check_branch
      %57 = sbr.rel (0) target = $region29
    $region28: #{tpu_custom_call.1} parent=1 // pred_region
      %58 = dma.done [#allocation7], 2048
    $region29: #{tpu_custom_call.1} parent=1 // pred_fallthru
      _
    // Predicated region
    $region30: #{tpu_custom_call.1} parent=1 // pred_check
      _
    $region31: #{tpu_custom_call.1} parent=1 // pred_check_branch
      %60 = sbr.rel (0) target = $region33
    $region32: #{tpu_custom_call.1} parent=1 // pred_region
      %61 = dma.done [#allocation7], 2048
    $region33: #{tpu_custom_call.1} parent=1 // pred_fallthru
      _
    %p62 = scmp.eq.s32.totalorder 0, 0
    // Predicated region
    $region34: #{tpu_custom_call.1} parent=1 // pred_check
      %p63 = pneg %p62
    $region35: #{tpu_custom_call.1} parent=1 // pred_check_branch
      %65 = sbr.rel (%p63) target = $region37
    $region36: #{tpu_custom_call.1} parent=1 // pred_region
      %66 = vst [vmem:[#allocation2] sm:$0xff] 0.0
      %67 = vst [vmem:[#allocation2 + $0x8] sm:$0xff] 0.0
    $region37: #{tpu_custom_call.1} parent=1 // pred_fallthru
      _
    %v68 = vld [vmem:[#allocation3] sm:$0xff]
    %v69 = vld [vmem:[#allocation3 + $0x8] sm:$0xff]
    %v70 = vld [vmem:[#allocation6] sm:$0xff]
    %v71 = vld [vmem:[#allocation6 + $0x8] sm:$0xff]
    %v72 = vld [vmem:[#allocation6 + $0x10] sm:$0xff]
    %v73 = vld [vmem:[#allocation6 + $0x18] sm:$0xff]
    %v74 = vld [vmem:[#allocation6 + $0x20] sm:$0xff]
    %v75 = vld [vmem:[#allocation6 + $0x28] sm:$0xff]
    %v76 = vld [vmem:[#allocation6 + $0x30] sm:$0xff]
    %v77 = vld [vmem:[#allocation6 + $0x38] sm:$0xff]
    %v78 = vld [vmem:[#allocation6 + $0x40] sm:$0xff]
    %v79 = vld [vmem:[#allocation6 + $0x48] sm:$0xff]
    %v80 = vld [vmem:[#allocation6 + $0x50] sm:$0xff]
    %v81 = vld [vmem:[#allocation6 + $0x58] sm:$0xff]
    %v82 = vld [vmem:[#allocation6 + $0x60] sm:$0xff]
    %v83 = vld [vmem:[#allocation6 + $0x68] sm:$0xff]
    %v84 = vld [vmem:[#allocation6 + $0x70] sm:$0xff]
    %v85 = vld [vmem:[#allocation6 + $0x78] sm:$0xff]
    %v86 = vld [vmem:[%s2] sm:$0x1]
    %v88 = vlaneseq
    %v89 = vshrl.u32 %v88, 7
    %v90 = vsub.s32 0, %v89
    %v91 = vrot.slane %v86, %v90
    %93 = vmatprep.subr.mxu0 0.0
    %94 = vmatpush1.msra.mxu0 %v85
    %95 = vmatprep.subr.mxu0 0.0
    %96 = vmatpush1.msra.mxu0 %v84
    %97 = vmatprep.subr.mxu0 0.0
    %98 = vmatpush1.msra.mxu0 %v83
    %99 = vmatprep.subr.mxu0 0.0
    %100 = vmatpush1.msra.mxu0 %v82
    %101 = vmatprep.subr.mxu0 0.0
    %102 = vmatpush1.msra.mxu0 %v81
    %103 = vmatprep.subr.mxu0 0.0
    %104 = vmatpush1.msra.mxu0 %v80
    %105 = vmatprep.subr.mxu0 0.0
    %106 = vmatpush1.msra.mxu0 %v79
    %107 = vmatprep.subr.mxu0 0.0
    %108 = vmatpush1.msra.mxu0 %v78
    %109 = vmatprep.subr.mxu0 0.0
    %110 = vmatpush1.msra.mxu0 %v77
    %111 = vmatprep.subr.mxu0 0.0
    %112 = vmatpush1.msra.mxu0 %v76
    %113 = vmatprep.subr.mxu0 0.0
    %114 = vmatpush1.msra.mxu0 %v75
    %115 = vmatprep.subr.mxu0 0.0
    %116 = vmatpush1.msra.mxu0 %v74
    %117 = vmatprep.subr.mxu0 0.0
    %118 = vmatpush1.msra.mxu0 %v73
    %119 = vmatprep.subr.mxu0 0.0
    %120 = vmatpush1.msra.mxu0 %v72
    %121 = vmatprep.subr.mxu0 0.0
    %122 = vmatpush1.msra.mxu0 %v71
    %123 = vmatprep.subr.mxu0 0.0
    %124 = vmatpush1.msra.mxu0 %v70
    %125 = vmatprep.subr.mxu0 0.0
    %126 = vmatpush2.msra.mxu0 0.0
    %127 = vmatprep.subr.mxu0 0.0
    %128 = vmatpush2.msra.mxu0 0.0
    %129 = vmatprep.subr.mxu0 0.0
    %130 = vmatpush2.msra.mxu0 0.0
    %131 = vmatprep.subr.mxu0 0.0
    %132 = vmatpush2.msra.mxu0 0.0
    %133 = vmatprep.subr.mxu0 0.0
    %134 = vmatpush2.msra.mxu0 0.0
    %135 = vmatprep.subr.mxu0 0.0
    %136 = vmatpush2.msra.mxu0 0.0
    %137 = vmatprep.subr.mxu0 0.0
    %138 = vmatpush2.msra.mxu0 0.0
    %139 = vmatprep.subr.mxu0 0.0
    %140 = vmatpush2.msra.mxu0 0.0
    %141 = vmatprep.subr.mxu0 0.0
    %142 = vmatpush2.msra.mxu0 0.0
    %143 = vmatprep.subr.mxu0 0.0
    %144 = vmatpush2.msra.mxu0 0.0
    %145 = vmatprep.subr.mxu0 0.0
    %146 = vmatpush2.msra.mxu0 0.0
    %147 = vmatprep.subr.mxu0 0.0
    %148 = vmatpush2.msra.mxu0 0.0
    %149 = vmatprep.subr.mxu0 0.0
    %150 = vmatpush2.msra.mxu0 0.0
    %151 = vmatprep.subr.mxu0 0.0
    %152 = vmatpush2.msra.mxu0 0.0
    %153 = vmatprep.subr.mxu0 0.0
    %154 = vmatpush2.msra.mxu0 0.0
    %155 = vmatprep.subr.mxu0 0.0
    %156 = vmatpush2.msra.mxu0 0.0
    %157 = vmatprep.mubr.f32.mxu0 0.0
    %158 = vmatmul.mubr.f32.gmra.mxu0 %v68
    %v159 = vpop.f32.mrf.mxu0
    %v160 = vadd.f32 %v91, %v159
    %v161 = vpop.f32.mrf.mxu0
    %162 = vmatprep.mubr.f32.mxu0 0.0
    %163 = vmatmul.mubr.f32.gmra.mxu0 %v69
    %v164 = vpop.f32.mrf.mxu0
    %v165 = vadd.f32 %v91, %v164
    %v166 = vpop.f32.mrf.mxu0
    %167 = vdwg.mxu0
    %v168 = vmax.f32 %v160, 0.0
    %v169 = vmax.f32 %v165, 0.0
    %v170 = vld [vmem:[#allocation2] sm:$0xff]
    %v171 = vld [vmem:[#allocation2 + $0x8] sm:$0xff]
    %v172 = vld [vmem:[#allocation8] sm:$0xff]
    %v173 = vld [vmem:[#allocation8 + $0x8] sm:$0xff]
    %v174 = vld [vmem:[#allocation8 + $0x10] sm:$0xff]
    %v175 = vld [vmem:[#allocation8 + $0x18] sm:$0xff]
    %v176 = vld [vmem:[#allocation8 + $0x20] sm:$0xff]
    %v177 = vld [vmem:[#allocation8 + $0x28] sm:$0xff]
    %v178 = vld [vmem:[#allocation8 + $0x30] sm:$0xff]
    %v179 = vld [vmem:[#allocation8 + $0x38] sm:$0xff]
    %v180 = vld [vmem:[#allocation8 + $0x40] sm:$0xff]
    %v181 = vld [vmem:[#allocation8 + $0x48] sm:$0xff]
    %v182 = vld [vmem:[#allocation8 + $0x50] sm:$0xff]
    %v183 = vld [vmem:[#allocation8 + $0x58] sm:$0xff]
    %v184 = vld [vmem:[#allocation8 + $0x60] sm:$0xff]
    %v185 = vld [vmem:[#allocation8 + $0x68] sm:$0xff]
    %v186 = vld [vmem:[#allocation8 + $0x70] sm:$0xff]
    %v187 = vld [vmem:[#allocation8 + $0x78] sm:$0xff]
    %188 = vmatprep.subr.mxu0 0.0
    %189 = vmatpush1.msra.mxu0 %v187
    %190 = vmatprep.subr.mxu0 0.0
    %191 = vmatpush1.msra.mxu0 %v186
    %192 = vmatprep.subr.mxu0 0.0
    %193 = vmatpush1.msra.mxu0 %v185
    %194 = vmatprep.subr.mxu0 0.0
    %195 = vmatpush1.msra.mxu0 %v184
    %196 = vmatprep.subr.mxu0 0.0
    %197 = vmatpush1.msra.mxu0 %v183
    %198 = vmatprep.subr.mxu0 0.0
    %199 = vmatpush1.msra.mxu0 %v182
    %200 = vmatprep.subr.mxu0 0.0
    %201 = vmatpush1.msra.mxu0 %v181
    %202 = vmatprep.subr.mxu0 0.0
    %203 = vmatpush1.msra.mxu0 %v180
    %204 = vmatprep.subr.mxu0 0.0
    %205 = vmatpush1.msra.mxu0 %v179
    %206 = vmatprep.subr.mxu0 0.0
    %207 = vmatpush1.msra.mxu0 %v178
    %208 = vmatprep.subr.mxu0 0.0
    %209 = vmatpush1.msra.mxu0 %v177
    %210 = vmatprep.subr.mxu0 0.0
    %211 = vmatpush1.msra.mxu0 %v176
    %212 = vmatprep.subr.mxu0 0.0
    %213 = vmatpush1.msra.mxu0 %v175
    %214 = vmatprep.subr.mxu0 0.0
    %215 = vmatpush1.msra.mxu0 %v174
    %216 = vmatprep.subr.mxu0 0.0
    %217 = vmatpush1.msra.mxu0 %v173
    %218 = vmatprep.subr.mxu0 0.0
    %219 = vmatpush1.msra.mxu0 %v172
    %220 = vmatprep.subr.mxu0 0.0
    %221 = vmatpush2.msra.mxu0 0.0
    %222 = vmatprep.subr.mxu0 0.0
    %223 = vmatpush2.msra.mxu0 0.0
    %224 = vmatprep.subr.mxu0 0.0
    %225 = vmatpush2.msra.mxu0 0.0
    %226 = vmatprep.subr.mxu0 0.0
    %227 = vmatpush2.msra.mxu0 0.0
    %228 = vmatprep.subr.mxu0 0.0
    %229 = vmatpush2.msra.mxu0 0.0
    %230 = vmatprep.subr.mxu0 0.0
    %231 = vmatpush2.msra.mxu0 0.0
    %232 = vmatprep.subr.mxu0 0.0
    %233 = vmatpush2.msra.mxu0 0.0
    %234 = vmatprep.subr.mxu0 0.0
    %235 = vmatpush2.msra.mxu0 0.0
    %236 = vmatprep.subr.mxu0 0.0
    %237 = vmatpush2.msra.mxu0 0.0
    %238 = vmatprep.subr.mxu0 0.0
    %239 = vmatpush2.msra.mxu0 0.0
    %240 = vmatprep.subr.mxu0 0.0
    %241 = vmatpush2.msra.mxu0 0.0
    %242 = vmatprep.subr.mxu0 0.0
    %243 = vmatpush2.msra.mxu0 0.0
    %244 = vmatprep.subr.mxu0 0.0
    %245 = vmatpush2.msra.mxu0 0.0
    %246 = vmatprep.subr.mxu0 0.0
    %247 = vmatpush2.msra.mxu0 0.0
    %248 = vmatprep.subr.mxu0 0.0
    %249 = vmatpush2.msra.mxu0 0.0
    %250 = vmatprep.subr.mxu0 0.0
    %251 = vmatpush2.msra.mxu0 0.0
    %252 = vmatprep.mubr.f32.mxu0 0.0
    %253 = vmatmul.mubr.f32.gmra.mxu0 %v168
    %v254 = vpop.f32.mrf.mxu0
    %v255 = vadd.f32 0.0, %v254
    %v256 = vpop.f32.mrf.mxu0
    %257 = vmatprep.mubr.f32.mxu0 0.0
    %258 = vmatmul.mubr.f32.gmra.mxu0 %v169
    %v259 = vpop.f32.mrf.mxu0
    %v260 = vadd.f32 0.0, %v259
    %v261 = vpop.f32.mrf.mxu0
    %262 = vdwg.mxu0
    %v263 = vadd.f32 %v170, %v255
    %v264 = vadd.f32 %v171, %v260
    %265 = vst [vmem:[#allocation2] sm:$0xff] %v263
    %266 = vst [vmem:[#allocation2 + $0x8] sm:$0xff] %v264
    // Predicated region
    $region38: #{tpu_custom_call.1} parent=1 // pred_check
      %p267 = pneg %p62
    $region39: #{tpu_custom_call.1} parent=1 // pred_check_branch
      %269 = sbr.rel (%p267) target = $region41
    $region40: #{tpu_custom_call.1} parent=1 // pred_region
      %v270 = vld [vmem:[#allocation2] sm:$0xff]
      %v271 = vld [vmem:[#allocation2 + $0x8] sm:$0xff]
      %v272 = vld [vmem:[%s4] sm:$0x1]
      %v274 = vlaneseq
      %v275 = vshrl.u32 %v274, 7
      %v276 = vsub.s32 0, %v275
      %v277 = vrot.slane %v272, %v276
      %v279 = vadd.f32 %v270, %v277
      %v280 = vadd.f32 %v271, %v277
      %281 = vst [vmem:[#allocation9] sm:$0xff] %v279
      %282 = vst [vmem:[#allocation9 + $0x8] sm:$0xff] %v280
    $region41: #{tpu_custom_call.1} parent=1 // pred_fallthru
      _
    // Predicated region
    $region42: #{tpu_custom_call.1} parent=1 // pred_check
      _
    $region43: #{tpu_custom_call.1} parent=1 // pred_check_branch
      %284 = sbr.rel (0) target = $region45
    $region44: #{tpu_custom_call.1} parent=1 // pred_region
      %s286 = ssub.s32 256, 256
      %287 = vsyncadd [#allocation5], %s286
      %s288 = sshll.u32 [#allocation9], 4
      %s289 = int_to_ptr.vmem [resolvable:$true] %s288
      %294 = dma.vmem_to_hbm [thread:$0]  %s289, 256, %s5, [#allocation5], 128, 128, 8
    $region45: #{tpu_custom_call.1} parent=1 // pred_fallthru
      _
    // Predicated region
    $region46: #{tpu_custom_call.1} parent=1 // pred_check
      _
    $region47: #{tpu_custom_call.1} parent=1 // pred_check_branch
      %296 = sbr.rel (0) target = $region49
    $region48: #{tpu_custom_call.1} parent=1 // pred_region
      %297 = dma.done [#allocation5], 256
    $region49: #{tpu_custom_call.1} parent=1 // pred_fallthru
      _
    %298 = vsyncpa [#allocation4], 1
    %299 = vsyncpa [#allocation7], 1
    %300 = vsyncpa [#allocation5], 1

// kernel: tpu_custom_call.1
$region0: #{tpu_custom_call.1}
  #allocation0 [shape = 'u32[]', space=smem, size = 0x4, offset = 0x4, fixed_abs, tag = 'smem constant byte address 0x4 - core index']
  #allocation1 [shape = 'u32[144,128]{1,0:T(1,128)}', space=vmem, size = 0x12000, scoped, tag = 'internal scratch']
  #allocation2 [shape = 'f32[16,128]{1,0:T(8,128)}', space=vmem, size = 0x2000, scoped, tag = 'scratch operand']
  %s0 = inlined_call_operand.hbm [shape: f32[16,128], index: 0, kind: input, shape index: {}]
  %s1 = inlined_call_operand.hbm [shape: f32[128,128], index: 1, kind: input, shape index: {}]
  %s2 = inlined_call_operand.vmem [shape: f32[1,128], index: 2, kind: input, shape index: {}]
  %s3 = inlined_call_operand.hbm [shape: f32[128,128], index: 3, kind: input, shape index: {}]
  %s4 = inlined_call_operand.vmem [shape: f32[1,128], index: 4, kind: input, shape index: {}]
  %s5 = inlined_call_operand.hbm [shape: f32[16,128], index: 5, kind: output, shape index: {}]
  %s6 = sld [smem:[#allocation0]]
  $region50: #{tpu_custom_call.1} parent=0
    _
  %s8 = ssub.s32 1, %s6
  %s9 = scalar_select 0, %s8, %s6
  $region1: #{tpu_custom_call.1} parent=0
    #allocation3 [shape = 'u8[8192]{0}', space=vmem, size = 0x2000, scoped, tag = 'input window, operand 0, single buffered']
    #allocation4 [shape = 's32[1]{0}', space=sflag, size = 0x4, scoped, tag = 'scoped memory for tpu_custom_call.1']
    #allocation5 [shape = 's32[1]{0}', space=sflag, size = 0x4, scoped, tag = 'scoped memory for tpu_custom_call.1']
    #allocation6 [shape = 'u8[65536]{0}', space=vmem, size = 0x10000, scoped, tag = 'input window, operand 1, single buffered']
    #allocation7 [shape = 's32[1]{0}', space=sflag, size = 0x4, scoped, tag = 'scoped memory for tpu_custom_call.1']
    #allocation8 [shape = 'u8[65536]{0}', space=vmem, size = 0x10000, scoped, tag = 'input window, operand 3, single buffered']
    #allocation9 [shape = 'u8[8192]{0}', space=vmem, size = 0x2000, scoped, tag = 'output window, operand 0, single buffered']
    %10 = vsyncpa [#allocation4], 0
    %11 = vsyncpa [#allocation7], 0
    %12 = vsyncpa [#allocation5], 0
    // Predicated region
    $region2: #{tpu_custom_call.1} parent=1 // pred_check
      _
    $region3: #{tpu_custom_call.1} parent=1 // pred_check_branch
      %14 = sbr.rel (0) target = $region5
    $region4: #{tpu_custom_call.1} parent=1 // pred_region
      %s16 = ssub.s32 256, 256
      %17 = vsyncadd [#allocation4], %s16
      %s18 = sshll.u32 [#allocation3], 4
      %s19 = int_to_ptr.vmem [resolvable:$true] %s18
      %24 = dma.hbm_to_vmem [thread:$0]  %s0, 256, %s19, [#allocation4], 128, 128, 8
    $region5: #{tpu_custom_call.1} parent=1 // pred_fallthru
      _
    // Predicated region
    $region6: #{tpu_custom_call.1} parent=1 // pred_check
      _
    $region7: #{tpu_custom_call.1} parent=1 // pred_check_branch
      %26 = sbr.rel (0) target = $region9
    $region8: #{tpu_custom_call.1} parent=1 // pred_region
      %s28 = ssub.s32 2048, 2048
      %29 = vsyncadd [#allocation7], %s28
      %s30 = sshll.u32 [#allocation6], 4
      %s31 = int_to_ptr.vmem [resolvable:$true] %s30
      %36 = dma.hbm_to_vmem [thread:$0]  %s1, 2048, %s31, [#allocation7], 128, 128, 8
    $region9: #{tpu_custom_call.1} parent=1 // pred_fallthru
      _
    // Predicated region
    $region10: #{tpu_custom_call.1} parent=1 // pred_check
      _
    $region11: #{tpu_custom_call.1} parent=1 // pred_check_branch
      %38 = sbr.rel (0) target = $region13
    $region12: #{tpu_custom_call.1} parent=1 // pred_region
      _
    $region13: #{tpu_custom_call.1} parent=1 // pred_fallthru
      _
    // Predicated region
    $region14: #{tpu_custom_call.1} parent=1 // pred_check
      _
    $region15: #{tpu_custom_call.1} parent=1 // pred_check_branch
      %40 = sbr.rel (0) target = $region17
    $region16: #{tpu_custom_call.1} parent=1 // pred_region
      %s42 = ssub.s32 2048, 2048
      %43 = vsyncadd [#allocation7], %s42
      %s44 = sshll.u32 [#allocation8], 4
      %s45 = int_to_ptr.vmem [resolvable:$true] %s44
      %50 = dma.hbm_to_vmem [thread:$0]  %s3, 2048, %s45, [#allocation7], 128, 128, 8
    $region17: #{tpu_custom_call.1} parent=1 // pred_fallthru
      _
    // Predicated region
    $region18: #{tpu_custom_call.1} parent=1 // pred_check
      _
    $region19: #{tpu_custom_call.1} parent=1 // pred_check_branch
      %52 = sbr.rel (0) target = $region21
    $region20: #{tpu_custom_call.1} parent=1 // pred_region
      _
    $region21: #{tpu_custom_call.1} parent=1 // pred_fallthru
      _
    // Predicated region
    $region22: #{tpu_custom_call.1} parent=1 // pred_check
      _
    $region23: #{tpu_custom_call.1} parent=1 // pred_check_branch
      %54 = sbr.rel (0) target = $region25
    $region24: #{tpu_custom_call.1} parent=1 // pred_region
      %55 = dma.done [#allocation4], 256
    $region25: #{tpu_custom_call.1} parent=1 // pred_fallthru
      _
    // Predicated region
    $region26: #{tpu_custom_call.1} parent=1 // pred_check
      _
    $region27: #{tpu_custom_call.1} parent=1 // pred_check_branch
      %57 = sbr.rel (0) target = $region29
    $region28: #{tpu_custom_call.1} parent=1 // pred_region
      %58 = dma.done [#allocation7], 2048
    $region29: #{tpu_custom_call.1} parent=1 // pred_fallthru
      _
    // Predicated region
    $region30: #{tpu_custom_call.1} parent=1 // pred_check
      _
    $region31: #{tpu_custom_call.1} parent=1 // pred_check_branch
      %60 = sbr.rel (0) target = $region33
    $region32: #{tpu_custom_call.1} parent=1 // pred_region
      %61 = dma.done [#allocation7], 2048
    $region33: #{tpu_custom_call.1} parent=1 // pred_fallthru
      _
    %p62 = scmp.eq.s32.totalorder 0, 0
    // Predicated region
    $region34: #{tpu_custom_call.1} parent=1 // pred_check
      %p63 = pneg %p62
    $region35: #{tpu_custom_call.1} parent=1 // pred_check_branch
      %65 = sbr.rel (%p63) target = $region37
    $region36: #{tpu_custom_call.1} parent=1 // pred_region
      %66 = vst [vmem:[#allocation2] sm:$0xff] 0.0
      %67 = vst [vmem:[#allocation2 + $0x8] sm:$0xff] 0.0
    $region37: #{tpu_custom_call.1} parent=1 // pred_fallthru
      _
    %v68 = vld [vmem:[#allocation3] sm:$0xff]
    %v69 = vld [vmem:[#allocation3 + $0x8] sm:$0xff]
    %v70 = vld [vmem:[#allocation6] sm:$0xff]
    %v71 = vld [vmem:[#allocation6 + $0x8] sm:$0xff]
    %v72 = vld [vmem:[#allocation6 + $0x10] sm:$0xff]
    %v73 = vld [vmem:[#allocation6 + $0x18] sm:$0xff]
    %v74 = vld [vmem:[#allocation6 + $0x20] sm:$0xff]
    %v75 = vld [vmem:[#allocation6 + $0x28] sm:$0xff]
    %v76 = vld [vmem:[#allocation6 + $0x30] sm:$0xff]
    %v77 = vld [vmem:[#allocation6 + $0x38] sm:$0xff]
    %v78 = vld [vmem:[#allocation6 + $0x40] sm:$0xff]
    %v79 = vld [vmem:[#allocation6 + $0x48] sm:$0xff]
    %v80 = vld [vmem:[#allocation6 + $0x50] sm:$0xff]
    %v81 = vld [vmem:[#allocation6 + $0x58] sm:$0xff]
    %v82 = vld [vmem:[#allocation6 + $0x60] sm:$0xff]
    %v83 = vld [vmem:[#allocation6 + $0x68] sm:$0xff]
    %v84 = vld [vmem:[#allocation6 + $0x70] sm:$0xff]
    %v85 = vld [vmem:[#allocation6 + $0x78] sm:$0xff]
    %v86 = vld [vmem:[%s2] sm:$0x1]
    %v88 = vlaneseq
    %v89 = vshrl.u32 %v88, 7
    %v90 = vsub.s32 0, %v89
    %v91 = vrot.slane %v86, %v90
    %93 = vmatprep.subr.mxu0 0.0
    %94 = vmatpush1.msra.mxu0 %v85
    %95 = vmatprep.subr.mxu0 0.0
    %96 = vmatpush1.msra.mxu0 %v84
    %97 = vmatprep.subr.mxu0 0.0
    %98 = vmatpush1.msra.mxu0 %v83
    %99 = vmatprep.subr.mxu0 0.0
    %100 = vmatpush1.msra.mxu0 %v82
    %101 = vmatprep.subr.mxu0 0.0
    %102 = vmatpush1.msra.mxu0 %v81
    %103 = vmatprep.subr.mxu0 0.0
    %104 = vmatpush1.msra.mxu0 %v80
    %105 = vmatprep.subr.mxu0 0.0
    %106 = vmatpush1.msra.mxu0 %v79
    %107 = vmatprep.subr.mxu0 0.0
    %108 = vmatpush1.msra.mxu0 %v78
    %109 = vmatprep.subr.mxu0 0.0
    %110 = vmatpush1.msra.mxu0 %v77
    %111 = vmatprep.subr.mxu0 0.0
    %112 = vmatpush1.msra.mxu0 %v76
    %113 = vmatprep.subr.mxu0 0.0
    %114 = vmatpush1.msra.mxu0 %v75
    %115 = vmatprep.subr.mxu0 0.0
    %116 = vmatpush1.msra.mxu0 %v74
    %117 = vmatprep.subr.mxu0 0.0
    %118 = vmatpush1.msra.mxu0 %v73
    %119 = vmatprep.subr.mxu0 0.0
    %120 = vmatpush1.msra.mxu0 %v72
    %121 = vmatprep.subr.mxu0 0.0
    %122 = vmatpush1.msra.mxu0 %v71
    %123 = vmatprep.subr.mxu0 0.0
    %124 = vmatpush1.msra.mxu0 %v70
    %125 = vmatprep.subr.mxu0 0.0
    %126 = vmatpush2.msra.mxu0 0.0
    %127 = vmatprep.subr.mxu0 0.0
    %128 = vmatpush2.msra.mxu0 0.0
    %129 = vmatprep.subr.mxu0 0.0
    %130 = vmatpush2.msra.mxu0 0.0
    %131 = vmatprep.subr.mxu0 0.0
    %132 = vmatpush2.msra.mxu0 0.0
    %133 = vmatprep.subr.mxu0 0.0
    %134 = vmatpush2.msra.mxu0 0.0
    %135 = vmatprep.subr.mxu0 0.0
    %136 = vmatpush2.msra.mxu0 0.0
    %137 = vmatprep.subr.mxu0 0.0
    %138 = vmatpush2.msra.mxu0 0.0
    %139 = vmatprep.subr.mxu0 0.0
    %140 = vmatpush2.msra.mxu0 0.0
    %141 = vmatprep.subr.mxu0 0.0
    %142 = vmatpush2.msra.mxu0 0.0
    %143 = vmatprep.subr.mxu0 0.0
    %144 = vmatpush2.msra.mxu0 0.0
    %145 = vmatprep.subr.mxu0 0.0
    %146 = vmatpush2.msra.mxu0 0.0
    %147 = vmatprep.subr.mxu0 0.0
    %148 = vmatpush2.msra.mxu0 0.0
    %149 = vmatprep.subr.mxu0 0.0
    %150 = vmatpush2.msra.mxu0 0.0
    %151 = vmatprep.subr.mxu0 0.0
    %152 = vmatpush2.msra.mxu0 0.0
    %153 = vmatprep.subr.mxu0 0.0
    %154 = vmatpush2.msra.mxu0 0.0
    %155 = vmatprep.subr.mxu0 0.0
    %156 = vmatpush2.msra.mxu0 0.0
    %157 = vmatprep.mubr.f32.mxu0 0.0
    %158 = vmatmul.mubr.f32.gmra.mxu0 %v68
    %v159 = vpop.f32.mrf.mxu0
    %v160 = vadd.f32 %v91, %v159
    %v161 = vpop.f32.mrf.mxu0
    %162 = vmatprep.mubr.f32.mxu0 0.0
    %163 = vmatmul.mubr.f32.gmra.mxu0 %v69
    %v164 = vpop.f32.mrf.mxu0
    %v165 = vadd.f32 %v91, %v164
    %v166 = vpop.f32.mrf.mxu0
    %167 = vdwg.mxu0
    %v168 = vmax.f32 %v160, 0.0
    %v169 = vmax.f32 %v165, 0.0
    %v170 = vld [vmem:[#allocation2] sm:$0xff]
    %v171 = vld [vmem:[#allocation2 + $0x8] sm:$0xff]
    %v172 = vld [vmem:[#allocation8] sm:$0xff]
    %v173 = vld [vmem:[#allocation8 + $0x8] sm:$0xff]
    %v174 = vld [vmem:[#allocation8 + $0x10] sm:$0xff]
    %v175 = vld [vmem:[#allocation8 + $0x18] sm:$0xff]
    %v176 = vld [vmem:[#allocation8 + $0x20] sm:$0xff]
    %v177 = vld [vmem:[#allocation8 + $0x28] sm:$0xff]
    %v178 = vld [vmem:[#allocation8 + $0x30] sm:$0xff]
    %v179 = vld [vmem:[#allocation8 + $0x38] sm:$0xff]
    %v180 = vld [vmem:[#allocation8 + $0x40] sm:$0xff]
    %v181 = vld [vmem:[#allocation8 + $0x48] sm:$0xff]
    %v182 = vld [vmem:[#allocation8 + $0x50] sm:$0xff]
    %v183 = vld [vmem:[#allocation8 + $0x58] sm:$0xff]
    %v184 = vld [vmem:[#allocation8 + $0x60] sm:$0xff]
    %v185 = vld [vmem:[#allocation8 + $0x68] sm:$0xff]
    %v186 = vld [vmem:[#allocation8 + $0x70] sm:$0xff]
    %v187 = vld [vmem:[#allocation8 + $0x78] sm:$0xff]
    %188 = vmatprep.subr.mxu0 0.0
    %189 = vmatpush1.msra.mxu0 %v187
    %190 = vmatprep.subr.mxu0 0.0
    %191 = vmatpush1.msra.mxu0 %v186
    %192 = vmatprep.subr.mxu0 0.0
    %193 = vmatpush1.msra.mxu0 %v185
    %194 = vmatprep.subr.mxu0 0.0
    %195 = vmatpush1.msra.mxu0 %v184
    %196 = vmatprep.subr.mxu0 0.0
    %197 = vmatpush1.msra.mxu0 %v183
    %198 = vmatprep.subr.mxu0 0.0
    %199 = vmatpush1.msra.mxu0 %v182
    %200 = vmatprep.subr.mxu0 0.0
    %201 = vmatpush1.msra.mxu0 %v181
    %202 = vmatprep.subr.mxu0 0.0
    %203 = vmatpush1.msra.mxu0 %v180
    %204 = vmatprep.subr.mxu0 0.0
    %205 = vmatpush1.msra.mxu0 %v179
    %206 = vmatprep.subr.mxu0 0.0
    %207 = vmatpush1.msra.mxu0 %v178
    %208 = vmatprep.subr.mxu0 0.0
    %209 = vmatpush1.msra.mxu0 %v177
    %210 = vmatprep.subr.mxu0 0.0
    %211 = vmatpush1.msra.mxu0 %v176
    %212 = vmatprep.subr.mxu0 0.0
    %213 = vmatpush1.msra.mxu0 %v175
    %214 = vmatprep.subr.mxu0 0.0
    %215 = vmatpush1.msra.mxu0 %v174
    %216 = vmatprep.subr.mxu0 0.0
    %217 = vmatpush1.msra.mxu0 %v173
    %218 = vmatprep.subr.mxu0 0.0
    %219 = vmatpush1.msra.mxu0 %v172
    %220 = vmatprep.subr.mxu0 0.0
    %221 = vmatpush2.msra.mxu0 0.0
    %222 = vmatprep.subr.mxu0 0.0
    %223 = vmatpush2.msra.mxu0 0.0
    %224 = vmatprep.subr.mxu0 0.0
    %225 = vmatpush2.msra.mxu0 0.0
    %226 = vmatprep.subr.mxu0 0.0
    %227 = vmatpush2.msra.mxu0 0.0
    %228 = vmatprep.subr.mxu0 0.0
    %229 = vmatpush2.msra.mxu0 0.0
    %230 = vmatprep.subr.mxu0 0.0
    %231 = vmatpush2.msra.mxu0 0.0
    %232 = vmatprep.subr.mxu0 0.0
    %233 = vmatpush2.msra.mxu0 0.0
    %234 = vmatprep.subr.mxu0 0.0
    %235 = vmatpush2.msra.mxu0 0.0
    %236 = vmatprep.subr.mxu0 0.0
    %237 = vmatpush2.msra.mxu0 0.0
    %238 = vmatprep.subr.mxu0 0.0
    %239 = vmatpush2.msra.mxu0 0.0
    %240 = vmatprep.subr.mxu0 0.0
    %241 = vmatpush2.msra.mxu0 0.0
    %242 = vmatprep.subr.mxu0 0.0
    %243 = vmatpush2.msra.mxu0 0.0
    %244 = vmatprep.subr.mxu0 0.0
    %245 = vmatpush2.msra.mxu0 0.0
    %246 = vmatprep.subr.mxu0 0.0
    %247 = vmatpush2.msra.mxu0 0.0
    %248 = vmatprep.subr.mxu0 0.0
    %249 = vmatpush2.msra.mxu0 0.0
    %250 = vmatprep.subr.mxu0 0.0
    %251 = vmatpush2.msra.mxu0 0.0
    %252 = vmatprep.mubr.f32.mxu0 0.0
    %253 = vmatmul.mubr.f32.gmra.mxu0 %v168
    %v254 = vpop.f32.mrf.mxu0
    %v255 = vadd.f32 0.0, %v254
    %v256 = vpop.f32.mrf.mxu0
    %257 = vmatprep.mubr.f32.mxu0 0.0
    %258 = vmatmul.mubr.f32.gmra.mxu0 %v169
    %v259 = vpop.f32.mrf.mxu0
    %v260 = vadd.f32 0.0, %v259
    %v261 = vpop.f32.mrf.mxu0
    %262 = vdwg.mxu0
    %v263 = vadd.f32 %v170, %v255
    %v264 = vadd.f32 %v171, %v260
    %265 = vst [vmem:[#allocation2] sm:$0xff] %v263
    %266 = vst [vmem:[#allocation2 + $0x8] sm:$0xff] %v264
    // Predicated region
    $region38: #{tpu_custom_call.1} parent=1 // pred_check
      %p267 = pneg %p62
    $region39: #{tpu_custom_call.1} parent=1 // pred_check_branch
      %269 = sbr.rel (%p267) target = $region41
    $region40: #{tpu_custom_call.1} parent=1 // pred_region
      %v270 = vld [vmem:[#allocation2] sm:$0xff]
      %v271 = vld [vmem:[#allocation2 + $0x8] sm:$0xff]
      %v272 = vld [vmem:[%s4] sm:$0x1]
      %v274 = vlaneseq
      %v275 = vshrl.u32 %v274, 7
      %v276 = vsub.s32 0, %v275
      %v277 = vrot.slane %v272, %v276
      %v279 = vadd.f32 %v270, %v277
      %v280 = vadd.f32 %v271, %v277
      %281 = vst [vmem:[#allocation9] sm:$0xff] %v279
      %282 = vst [vmem:[#allocation9 + $0x8] sm:$0xff] %v280
    $region41: #{tpu_custom_call.1} parent=1 // pred_fallthru
      _
    // Predicated region
    $region42: #{tpu_custom_call.1} parent=1 // pred_check
      _
    $region43: #{tpu_custom_call.1} parent=1 // pred_check_branch
      %284 = sbr.rel (0) target = $region45
    $region44: #{tpu_custom_call.1} parent=1 // pred_region
      %s286 = ssub.s32 256, 256
      %287 = vsyncadd [#allocation5], %s286
      %s288 = sshll.u32 [#allocation9], 4
      %s289 = int_to_ptr.vmem [resolvable:$true] %s288
      %294 = dma.vmem_to_hbm [thread:$0]  %s289, 256, %s5, [#allocation5], 128, 128, 8
    $region45: #{tpu_custom_call.1} parent=1 // pred_fallthru
      _
    // Predicated region
    $region46: #{tpu_custom_call.1} parent=1 // pred_check
      _
    $region47: #{tpu_custom_call.1} parent=1 // pred_check_branch
      %296 = sbr.rel (0) target = $region49
    $region48: #{tpu_custom_call.1} parent=1 // pred_region
      %297 = dma.done [#allocation5], 256
    $region49: #{tpu_custom_call.1} parent=1 // pred_fallthru
      _
    %298 = vsyncpa [#allocation4], 1
    %299 = vsyncpa [#allocation7], 1
    %300 = vsyncpa [#allocation5], 1

</llo_original>
